<compile_context>
chip_gen: v7x
topology: tpu7x:2x2x1
jax: 0.10.0
libtpu: 0.0.40
codegen_flags: <defaults>
</compile_context>

<pallas_src>
import jax
import jax.numpy as jnp
from jax.experimental import pallas as pl
from jax.experimental.pallas import tpu as pltpu


def discriminator_kernel(x_ref, w1_ref, b1_ref, w2_ref, b2_ref, w3_ref, b3_ref, o_ref):
    # All three matmuls + LeakyReLU fused; operands are VMEM-resident for this tile.
    x = x_ref[...]

    h1 = jnp.dot(x, w1_ref[...], preferred_element_type=jnp.float32) + b1_ref[...]
    h1 = jnp.where(h1 > 0, h1, 0.01 * h1)          # LeakyReLU (default slope 0.01)

    h2 = jnp.dot(h1, w2_ref[...], preferred_element_type=jnp.float32) + b2_ref[...]
    h2 = jnp.where(h2 > 0, h2, 0.01 * h2)          # LeakyReLU

    out = jnp.dot(h2, w3_ref[...], preferred_element_type=jnp.float32) + b3_ref[...]
    o_ref[...] = out.astype(o_ref.dtype)


def _round_up(x, m):
    return ((x + m - 1) // m) * m


def discriminator_forward(x, params, *, tb=256):
    """x: (B, n_hidden) float32.  params: dict of w1,b1,w2,b2,w3,b3 (already (in,out))."""
    B, H = x.shape
    n_out = params["w3"].shape[1]
    dtype = x.dtype

    # Lane-pad feature dims to multiples of 128; pad the tiny n_out=2 to 128 lanes.
    H_pad = _round_up(max(H, 1), 128)
    OUT_PAD = _round_up(max(n_out, 1), 128)

    # Batch tile: 256 rows when the batch is large, otherwise a single 8-aligned tile.
    TB = tb if B >= tb else _round_up(B, 8)
    B_pad = _round_up(B, TB)

    def pad2(a, rows, cols):
        return jnp.pad(a, ((0, rows - a.shape[0]), (0, cols - a.shape[1])))

    x_p = pad2(x, B_pad, H_pad)
    w1_p = pad2(params["w1"], H_pad, H_pad)
    b1_p = pad2(params["b1"], 1, H_pad)
    w2_p = pad2(params["w2"], H_pad, H_pad)
    b2_p = pad2(params["b2"], 1, H_pad)
    w3_p = pad2(params["w3"], H_pad, OUT_PAD)
    b3_p = pad2(params["b3"], 1, OUT_PAD)

    # Weight/bias specs return a constant block index -> VMEM-resident across the grid.
    resident = lambda shape: pl.BlockSpec(shape, lambda i, _s=shape: tuple(0 for _ in _s))

    # TODO(synk): for very large H (>= ~2048 on v7x's 64 MiB VMEM) the (H,H) weights
    # should be K-tiled with an f32 accumulator scratch instead of staying fully resident.
    out_p = pl.pallas_call(
        discriminator_kernel,
        out_shape=jax.ShapeDtypeStruct((B_pad, OUT_PAD), dtype),
        grid=(B_pad // TB,),
        in_specs=[
            pl.BlockSpec((TB, H_pad), lambda i: (i, 0)),      # x: tiled over batch
            resident((H_pad, H_pad)), resident((1, H_pad)),   # w1, b1
            resident((H_pad, H_pad)), resident((1, H_pad)),   # w2, b2
            resident((H_pad, OUT_PAD)), resident((1, OUT_PAD)),  # w3, b3 (lane-padded)
        ],
        out_specs=pl.BlockSpec((TB, OUT_PAD), lambda i: (i, 0)),
        compiler_params=pltpu.CompilerParams(
            dimension_semantics=("parallel",),   # shard batch tiles across v7x's 2 TCs
            vmem_limit_bytes=64 << 20,
        ),
    )(x_p, w1_p, b1_p, w2_p, b2_p, w3_p, b3_p)

    return out_p[:B, :n_out]


def init_params(key, n_hidden, n_out=2, dtype=jnp.float32):
    """Deterministic init mirroring torch.nn.Linear shapes (stored as (in, out))."""
    ks = jax.random.split(key, 6)

    def linear(kw, kb, fan_in, fan_out):
        bound = 1.0 / jnp.sqrt(fan_in)
        w = jax.random.uniform(kw, (fan_in, fan_out), dtype, -bound, bound)
        b = jax.random.uniform(kb, (1, fan_out), dtype, -bound, bound)
        return w, b

    w1, b1 = linear(ks[0], ks[1], n_hidden, n_hidden)
    w2, b2 = linear(ks[2], ks[3], n_hidden, n_hidden)
    w3, b3 = linear(ks[4], ks[5], n_hidden, n_out)
    return {"w1": w1, "b1": b1, "w2": w2, "b2": b2, "w3": w3, "b3": b3}


def discriminator_reference(x, p):
    h1 = x @ p["w1"] + p["b1"]
    h1 = jnp.where(h1 > 0, h1, 0.01 * h1)
    h2 = h1 @ p["w2"] + p["b2"]
    h2 = jnp.where(h2 > 0, h2, 0.01 * h2)
    return h2 @ p["w3"] + p["b3"]


if __name__ == "__main__":
    n_hidden = 32
    batch = 8

    key = jax.random.PRNGKey(0)
    k_x, k_p = jax.random.split(key)
    x = jax.random.normal(k_x, (batch, n_hidden), jnp.float32)
    params = init_params(k_p, n_hidden)

    out = discriminator_forward(x, params)
    out = jax.block_until_ready(out)

    ref = discriminator_reference(x, params)
    assert out.shape == (batch, 2), out.shape
    assert jnp.allclose(out, ref, atol=1e-5, rtol=1e-5), "mismatch vs reference"

    print("KERNEL_OK")
</pallas_src>

<mosaic_0001>
module attributes {stable_mosaic.version = 11 : i64} {
  func.func @discriminator_kernel(%arg0: i32, %arg1: memref<8x128xf32, #tpu.memory_space<vmem>>, %arg2: memref<128x128xf32, #tpu.memory_space<vmem>>, %arg3: memref<1x128xf32, #tpu.memory_space<vmem>>, %arg4: memref<128x128xf32, #tpu.memory_space<vmem>>, %arg5: memref<1x128xf32, #tpu.memory_space<vmem>>, %arg6: memref<128x128xf32, #tpu.memory_space<vmem>>, %arg7: memref<1x128xf32, #tpu.memory_space<vmem>>, %arg8: memref<8x128xf32, #tpu.memory_space<vmem>>) attributes {dimension_semantics = [#tpu.dimension_semantics<parallel>], iteration_bounds = array<i64: 1>, scalar_prefetch = 0 : i64, scratch_operands = 0 : i64, tpu.core_type = #tpu.core_type<tc>, window_params = [{transform_indices = @transform_0, window_bounds = array<i64: 8, 128>}, {pipeline_mode = #tpu.pipeline_mode<synchronous>, transform_indices = @transform_1, window_bounds = array<i64: 128, 128>}, {pipeline_mode = #tpu.pipeline_mode<synchronous>, transform_indices = @transform_2, window_bounds = array<i64: 1, 128>}, {pipeline_mode = #tpu.pipeline_mode<synchronous>, transform_indices = @transform_3, window_bounds = array<i64: 128, 128>}, {pipeline_mode = #tpu.pipeline_mode<synchronous>, transform_indices = @transform_4, window_bounds = array<i64: 1, 128>}, {pipeline_mode = #tpu.pipeline_mode<synchronous>, transform_indices = @transform_5, window_bounds = array<i64: 128, 128>}, {pipeline_mode = #tpu.pipeline_mode<synchronous>, transform_indices = @transform_6, window_bounds = array<i64: 1, 128>}, {transform_indices = @transform_7, window_bounds = array<i64: 8, 128>}]} {
    %c0 = arith.constant 0 : index
    %c0_0 = arith.constant 0 : index
    %0 = vector.load %arg1[%c0, %c0_0] : memref<8x128xf32, #tpu.memory_space<vmem>>, vector<8x128xf32>
    %c0_1 = arith.constant 0 : index
    %c0_2 = arith.constant 0 : index
    %1 = vector.load %arg2[%c0_1, %c0_2] : memref<128x128xf32, #tpu.memory_space<vmem>>, vector<128x128xf32>
    %cst = arith.constant dense<0.000000e+00> : vector<8x128xf32>
    %2 = tpu.matmul %0, %1, %cst {dimension_numbers = #tpu.dot_dimension_numbers<[1], [0], [0], [1], [0, 0, 1, 1], [], []>} : vector<8x128xf32>, vector<128x128xf32>, vector<8x128xf32> -> vector<8x128xf32>
    %c0_3 = arith.constant 0 : index
    %c0_4 = arith.constant 0 : index
    %3 = vector.load %arg3[%c0_3, %c0_4] : memref<1x128xf32, #tpu.memory_space<vmem>>, vector<1x128xf32>
    %4 = vector.broadcast %3 : vector<1x128xf32> to vector<8x128xf32>
    %5 = arith.addf %2, %4 : vector<8x128xf32>
    %cst_5 = arith.constant 0.000000e+00 : f32
    %6 = vector.broadcast %cst_5 : f32 to vector<8x128xf32>
    %7 = arith.cmpf ogt, %5, %6 : vector<8x128xf32>
    %cst_6 = arith.constant 0.00999999977 : f32
    %8 = vector.broadcast %cst_6 : f32 to vector<8x128xf32>
    %9 = arith.mulf %8, %5 : vector<8x128xf32>
    %10 = arith.select %7, %5, %9 : vector<8x128xi1>, vector<8x128xf32>
    %c0_7 = arith.constant 0 : index
    %c0_8 = arith.constant 0 : index
    %11 = vector.load %arg4[%c0_7, %c0_8] : memref<128x128xf32, #tpu.memory_space<vmem>>, vector<128x128xf32>
    %cst_9 = arith.constant dense<0.000000e+00> : vector<8x128xf32>
    %12 = tpu.matmul %10, %11, %cst_9 {dimension_numbers = #tpu.dot_dimension_numbers<[1], [0], [0], [1], [0, 0, 1, 1], [], []>} : vector<8x128xf32>, vector<128x128xf32>, vector<8x128xf32> -> vector<8x128xf32>
    %c0_10 = arith.constant 0 : index
    %c0_11 = arith.constant 0 : index
    %13 = vector.load %arg5[%c0_10, %c0_11] : memref<1x128xf32, #tpu.memory_space<vmem>>, vector<1x128xf32>
    %14 = vector.broadcast %13 : vector<1x128xf32> to vector<8x128xf32>
    %15 = arith.addf %12, %14 : vector<8x128xf32>
    %cst_12 = arith.constant 0.000000e+00 : f32
    %16 = vector.broadcast %cst_12 : f32 to vector<8x128xf32>
    %17 = arith.cmpf ogt, %15, %16 : vector<8x128xf32>
    %cst_13 = arith.constant 0.00999999977 : f32
    %18 = vector.broadcast %cst_13 : f32 to vector<8x128xf32>
    %19 = arith.mulf %18, %15 : vector<8x128xf32>
    %20 = arith.select %17, %15, %19 : vector<8x128xi1>, vector<8x128xf32>
    %c0_14 = arith.constant 0 : index
    %c0_15 = arith.constant 0 : index
    %21 = vector.load %arg6[%c0_14, %c0_15] : memref<128x128xf32, #tpu.memory_space<vmem>>, vector<128x128xf32>
    %cst_16 = arith.constant dense<0.000000e+00> : vector<8x128xf32>
    %22 = tpu.matmul %20, %21, %cst_16 {dimension_numbers = #tpu.dot_dimension_numbers<[1], [0], [0], [1], [0, 0, 1, 1], [], []>} : vector<8x128xf32>, vector<128x128xf32>, vector<8x128xf32> -> vector<8x128xf32>
    %c0_17 = arith.constant 0 : index
    %c0_18 = arith.constant 0 : index
    %23 = vector.load %arg7[%c0_17, %c0_18] : memref<1x128xf32, #tpu.memory_space<vmem>>, vector<1x128xf32>
    %24 = vector.broadcast %23 : vector<1x128xf32> to vector<8x128xf32>
    %25 = arith.addf %22, %24 : vector<8x128xf32>
    %c0_19 = arith.constant 0 : index
    %c0_20 = arith.constant 0 : index
    %26 = vector.load %arg8[%c0_19, %c0_20] : memref<8x128xf32, #tpu.memory_space<vmem>>, vector<8x128xf32>
    tpu.vector_store %arg8[%c0_19, %c0_20], %25 {strides = array<i32>} : memref<8x128xf32, #tpu.memory_space<vmem>>, vector<8x128xf32>,
    return
  }
  func.func @transform_0(%arg0: i32) -> (i32, i32) {
    %c0_i32 = arith.constant 0 : i32
    %c0_i32_0 = arith.constant 0 : i32
    return %arg0, %c0_i32 : i32, i32
  }
  func.func @transform_1(%arg0: i32) -> (i32, i32) {
    %c0_i32 = arith.constant 0 : i32
    %c0_i32_0 = arith.constant 0 : i32
    %c0_i32_1 = arith.constant 0 : i32
    return %c0_i32, %c0_i32_0 : i32, i32
  }
  func.func @transform_2(%arg0: i32) -> (i32, i32) {
    %c0_i32 = arith.constant 0 : i32
    %c0_i32_0 = arith.constant 0 : i32
    %c0_i32_1 = arith.constant 0 : i32
    return %c0_i32, %c0_i32_0 : i32, i32
  }
  func.func @transform_3(%arg0: i32) -> (i32, i32) {
    %c0_i32 = arith.constant 0 : i32
    %c0_i32_0 = arith.constant 0 : i32
    %c0_i32_1 = arith.constant 0 : i32
    return %c0_i32, %c0_i32_0 : i32, i32
  }
  func.func @transform_4(%arg0: i32) -> (i32, i32) {
    %c0_i32 = arith.constant 0 : i32
    %c0_i32_0 = arith.constant 0 : i32
    %c0_i32_1 = arith.constant 0 : i32
    return %c0_i32, %c0_i32_0 : i32, i32
  }
  func.func @transform_5(%arg0: i32) -> (i32, i32) {
    %c0_i32 = arith.constant 0 : i32
    %c0_i32_0 = arith.constant 0 : i32
    %c0_i32_1 = arith.constant 0 : i32
    return %c0_i32, %c0_i32_0 : i32, i32
  }
  func.func @transform_6(%arg0: i32) -> (i32, i32) {
    %c0_i32 = arith.constant 0 : i32
    %c0_i32_0 = arith.constant 0 : i32
    %c0_i32_1 = arith.constant 0 : i32
    return %c0_i32, %c0_i32_0 : i32, i32
  }
  func.func @transform_7(%arg0: i32) -> (i32, i32) {
    %c0_i32 = arith.constant 0 : i32
    %c0_i32_0 = arith.constant 0 : i32
    return %arg0, %c0_i32 : i32, i32
  }
}

</mosaic_0001>

<llo_original>
// kernel: tpu_custom_call.1
$region0: #{tpu_custom_call.1}
  #allocation0 [shape = 'u32[]', space=smem, size = 0x4, offset = 0x4, fixed_abs, tag = 'smem constant byte address 0x4 - core index']
  #allocation1 [shape = 'u32[144,128]{1,0:T(1,128)}', space=vmem, size = 0x12000, scoped, tag = 'internal scratch']
  %s0 = inlined_call_operand.hbm [shape: f32[8,128], index: 0, kind: input, shape index: {}]
  %s1 = inlined_call_operand.hbm [shape: f32[128,128], index: 1, kind: input, shape index: {}]
  %s2 = inlined_call_operand.hbm [shape: f32[1,128], index: 2, kind: input, shape index: {}]
  %s3 = inlined_call_operand.hbm [shape: f32[128,128], index: 3, kind: input, shape index: {}]
  %s4 = inlined_call_operand.hbm [shape: f32[1,128], index: 4, kind: input, shape index: {}]
  %s5 = inlined_call_operand.hbm [shape: f32[128,128], index: 5, kind: input, shape index: {}]
  %s6 = inlined_call_operand.hbm [shape: f32[1,128], index: 6, kind: input, shape index: {}]
  %s7 = inlined_call_operand.hbm [shape: f32[8,128], index: 7, kind: output, shape index: {}]
  %s8 = sld [smem:[#allocation0]]
  $region66: #{tpu_custom_call.1} parent=0
    _
  %s10 = ssub.s32 1, %s8
  %s11 = scalar_select 0, %s10, %s8
  $region1: #{tpu_custom_call.1} parent=0
    #allocation2 [shape = 'u8[4096]{0}', space=vmem, size = 0x1000, scoped, tag = 'input window, operand 0, single buffered']
    #allocation3 [shape = 's32[1]{0}', space=sflag, size = 0x4, scoped, tag = 'scoped memory for tpu_custom_call.1']
    #allocation4 [shape = 's32[1]{0}', space=sflag, size = 0x4, scoped, tag = 'scoped memory for tpu_custom_call.1']
    #allocation5 [shape = 'u8[65536]{0}', space=vmem, size = 0x10000, scoped, tag = 'input window, operand 1, single buffered']
    #allocation6 [shape = 's32[1]{0}', space=sflag, size = 0x4, scoped, tag = 'scoped memory for tpu_custom_call.1']
    #allocation7 [shape = 'u8[512]{0}', space=vmem, size = 0x400, scoped, tag = 'input window, operand 2, single buffered']
    #allocation8 [shape = 'u8[65536]{0}', space=vmem, size = 0x10000, scoped, tag = 'input window, operand 3, single buffered']
    #allocation9 [shape = 's32[1]{0}', space=sflag, size = 0x4, scoped, tag = 'scoped memory for tpu_custom_call.1']
    #allocation10 [shape = 'u8[512]{0}', space=vmem, size = 0x400, scoped, tag = 'input window, operand 4, single buffered']
    #allocation11 [shape = 'u8[65536]{0}', space=vmem, size = 0x10000, scoped, tag = 'input window, operand 5, single buffered']
    #allocation12 [shape = 's32[1]{0}', space=sflag, size = 0x4, scoped, tag = 'scoped memory for tpu_custom_call.1']
    #allocation13 [shape = 'u8[512]{0}', space=vmem, size = 0x400, scoped, tag = 'input window, operand 6, single buffered']
    #allocation14 [shape = 'u8[4096]{0}', space=vmem, size = 0x1000, scoped, tag = 'output window, operand 0, single buffered']
    %12 = vsyncpa [#allocation3], 0
    %13 = vsyncpa [#allocation6], 0
    %14 = vsyncpa [#allocation9], 0
    %15 = vsyncpa [#allocation12], 0
    %16 = vsyncpa [#allocation4], 0
    // Predicated region
    $region2: #{tpu_custom_call.1} parent=1 // pred_check
      _
    $region3: #{tpu_custom_call.1} parent=1 // pred_check_branch
      %18 = sbr.rel (0) target = $region5
    $region4: #{tpu_custom_call.1} parent=1 // pred_region
      %s20 = ssub.s32 128, 128
      %21 = vsyncadd [#allocation3], %s20
      %s23 = sshll.u32 [#allocation2], 4
      %s24 = int_to_ptr.vmem [resolvable:$true] %s23
      %26 = dma.hbm_to_vmem [thread:$0]  %s0, 128, %s24, [#allocation3]
    $region5: #{tpu_custom_call.1} parent=1 // pred_fallthru
      _
    // Predicated region
    $region6: #{tpu_custom_call.1} parent=1 // pred_check
      _
    $region7: #{tpu_custom_call.1} parent=1 // pred_check_branch
      %28 = sbr.rel (0) target = $region9
    $region8: #{tpu_custom_call.1} parent=1 // pred_region
      %s30 = ssub.s32 2048, 2048
      %31 = vsyncadd [#allocation6], %s30
      %s32 = sshll.u32 [#allocation5], 4
      %s33 = int_to_ptr.vmem [resolvable:$true] %s32
      %38 = dma.hbm_to_vmem [thread:$0]  %s1, 2048, %s33, [#allocation6], 128, 128, 8
    $region9: #{tpu_custom_call.1} parent=1 // pred_fallthru
      _
    // Predicated region
    $region10: #{tpu_custom_call.1} parent=1 // pred_check
      _
    $region11: #{tpu_custom_call.1} parent=1 // pred_check_branch
      %40 = sbr.rel (0) target = $region13
    $region12: #{tpu_custom_call.1} parent=1 // pred_region
      %s42 = ssub.s32 16, 16
      %43 = vsyncadd [#allocation6], %s42
      %s45 = sshll.u32 [#allocation7], 4
      %s46 = int_to_ptr.vmem [resolvable:$true] %s45
      %48 = dma.hbm_to_vmem [thread:$0]  %s2, 16, %s46, [#allocation6]
    $region13: #{tpu_custom_call.1} parent=1 // pred_fallthru
      _
    // Predicated region
    $region14: #{tpu_custom_call.1} parent=1 // pred_check
      _
    $region15: #{tpu_custom_call.1} parent=1 // pred_check_branch
      %50 = sbr.rel (0) target = $region17
    $region16: #{tpu_custom_call.1} parent=1 // pred_region
      %s52 = ssub.s32 2048, 2048
      %53 = vsyncadd [#allocation9], %s52
      %s54 = sshll.u32 [#allocation8], 4
      %s55 = int_to_ptr.vmem [resolvable:$true] %s54
      %60 = dma.hbm_to_vmem [thread:$0]  %s3, 2048, %s55, [#allocation9], 128, 128, 8
    $region17: #{tpu_custom_call.1} parent=1 // pred_fallthru
      _
    // Predicated region
    $region18: #{tpu_custom_call.1} parent=1 // pred_check
      _
    $region19: #{tpu_custom_call.1} parent=1 // pred_check_branch
      %62 = sbr.rel (0) target = $region21
    $region20: #{tpu_custom_call.1} parent=1 // pred_region
      %s64 = ssub.s32 16, 16
      %65 = vsyncadd [#allocation9], %s64
      %s67 = sshll.u32 [#allocation10], 4
      %s68 = int_to_ptr.vmem [resolvable:$true] %s67
      %70 = dma.hbm_to_vmem [thread:$0]  %s4, 16, %s68, [#allocation9]
    $region21: #{tpu_custom_call.1} parent=1 // pred_fallthru
      _
    // Predicated region
    $region22: #{tpu_custom_call.1} parent=1 // pred_check
      _
    $region23: #{tpu_custom_call.1} parent=1 // pred_check_branch
      %72 = sbr.rel (0) target = $region25
    $region24: #{tpu_custom_call.1} parent=1 // pred_region
      %s74 = ssub.s32 2048, 2048
      %75 = vsyncadd [#allocation12], %s74
      %s76 = sshll.u32 [#allocation11], 4
      %s77 = int_to_ptr.vmem [resolvable:$true] %s76
      %82 = dma.hbm_to_vmem [thread:$0]  %s5, 2048, %s77, [#allocation12], 128, 128, 8
    $region25: #{tpu_custom_call.1} parent=1 // pred_fallthru
      _
    // Predicated region
    $region26: #{tpu_custom_call.1} parent=1 // pred_check
      _
    $region27: #{tpu_custom_call.1} parent=1 // pred_check_branch
      %84 = sbr.rel (0) target = $region29
    $region28: #{tpu_custom_call.1} parent=1 // pred_region
      %s86 = ssub.s32 16, 16
      %87 = vsyncadd [#allocation12], %s86
      %s89 = sshll.u32 [#allocation13], 4
      %s90 = int_to_ptr.vmem [resolvable:$true] %s89
      %92 = dma.hbm_to_vmem [thread:$0]  %s6, 16, %s90, [#allocation12]
    $region29: #{tpu_custom_call.1} parent=1 // pred_fallthru
      _
    // Predicated region
    $region30: #{tpu_custom_call.1} parent=1 // pred_check
      _
    $region31: #{tpu_custom_call.1} parent=1 // pred_check_branch
      %94 = sbr.rel (0) target = $region33
    $region32: #{tpu_custom_call.1} parent=1 // pred_region
      %95 = dma.done [#allocation3], 128
    $region33: #{tpu_custom_call.1} parent=1 // pred_fallthru
      _
    // Predicated region
    $region34: #{tpu_custom_call.1} parent=1 // pred_check
      _
    $region35: #{tpu_custom_call.1} parent=1 // pred_check_branch
      %97 = sbr.rel (0) target = $region37
    $region36: #{tpu_custom_call.1} parent=1 // pred_region
      %98 = dma.done [#allocation6], 2048
    $region37: #{tpu_custom_call.1} parent=1 // pred_fallthru
      _
    // Predicated region
    $region38: #{tpu_custom_call.1} parent=1 // pred_check
      _
    $region39: #{tpu_custom_call.1} parent=1 // pred_check_branch
      %100 = sbr.rel (0) target = $region41
    $region40: #{tpu_custom_call.1} parent=1 // pred_region
      %101 = dma.done [#allocation6], 16
    $region41: #{tpu_custom_call.1} parent=1 // pred_fallthru
      _
    // Predicated region
    $region42: #{tpu_custom_call.1} parent=1 // pred_check
      _
    $region43: #{tpu_custom_call.1} parent=1 // pred_check_branch
      %103 = sbr.rel (0) target = $region45
    $region44: #{tpu_custom_call.1} parent=1 // pred_region
      %104 = dma.done [#allocation9], 2048
    $region45: #{tpu_custom_call.1} parent=1 // pred_fallthru
      _
    // Predicated region
    $region46: #{tpu_custom_call.1} parent=1 // pred_check
      _
    $region47: #{tpu_custom_call.1} parent=1 // pred_check_branch
      %106 = sbr.rel (0) target = $region49
    $region48: #{tpu_custom_call.1} parent=1 // pred_region
      %107 = dma.done [#allocation9], 16
    $region49: #{tpu_custom_call.1} parent=1 // pred_fallthru
      _
    // Predicated region
    $region50: #{tpu_custom_call.1} parent=1 // pred_check
      _
    $region51: #{tpu_custom_call.1} parent=1 // pred_check_branch
      %109 = sbr.rel (0) target = $region53
    $region52: #{tpu_custom_call.1} parent=1 // pred_region
      %110 = dma.done [#allocation12], 2048
    $region53: #{tpu_custom_call.1} parent=1 // pred_fallthru
      _
    // Predicated region
    $region54: #{tpu_custom_call.1} parent=1 // pred_check
      _
    $region55: #{tpu_custom_call.1} parent=1 // pred_check_branch
      %112 = sbr.rel (0) target = $region57
    $region56: #{tpu_custom_call.1} parent=1 // pred_region
      %113 = dma.done [#allocation12], 16
    $region57: #{tpu_custom_call.1} parent=1 // pred_fallthru
      _
    %v114 = vld [vmem:[#allocation2] sm:$0xff]
    %v115 = vld [vmem:[#allocation5] sm:$0xff]
    %v116 = vld [vmem:[#allocation5 + $0x8] sm:$0xff]
    %v117 = vld [vmem:[#allocation5 + $0x10] sm:$0xff]
    %v118 = vld [vmem:[#allocation5 + $0x18] sm:$0xff]
    %v119 = vld [vmem:[#allocation5 + $0x20] sm:$0xff]
    %v120 = vld [vmem:[#allocation5 + $0x28] sm:$0xff]
    %v121 = vld [vmem:[#allocation5 + $0x30] sm:$0xff]
    %v122 = vld [vmem:[#allocation5 + $0x38] sm:$0xff]
    %v123 = vld [vmem:[#allocation5 + $0x40] sm:$0xff]
    %v124 = vld [vmem:[#allocation5 + $0x48] sm:$0xff]
    %v125 = vld [vmem:[#allocation5 + $0x50] sm:$0xff]
    %v126 = vld [vmem:[#allocation5 + $0x58] sm:$0xff]
    %v127 = vld [vmem:[#allocation5 + $0x60] sm:$0xff]
    %v128 = vld [vmem:[#allocation5 + $0x68] sm:$0xff]
    %v129 = vld [vmem:[#allocation5 + $0x70] sm:$0xff]
    %v130 = vld [vmem:[#allocation5 + $0x78] sm:$0xff]
    %v131 = vld [vmem:[#allocation7] sm:$0x1]
    %v133 = vlaneseq
    %v134 = vshrl.u32 %v133, 7
    %v135 = vsub.s32 0, %v134
    %v136 = vrot.slane %v131, %v135
    %138 = vmatprep.subr.mxu0 0.0
    %139 = vmatpush1.msra.mxu0 %v115
    %140 = vmatprep.subr.mxu0 0.0
    %141 = vmatpush1.msra.mxu0 %v116
    %142 = vmatprep.subr.mxu0 0.0
    %143 = vmatpush1.msra.mxu0 %v117
    %144 = vmatprep.subr.mxu0 0.0
    %145 = vmatpush1.msra.mxu0 %v118
    %146 = vmatprep.subr.mxu0 0.0
    %147 = vmatpush1.msra.mxu0 %v119
    %148 = vmatprep.subr.mxu0 0.0
    %149 = vmatpush1.msra.mxu0 %v120
    %150 = vmatprep.subr.mxu0 0.0
    %151 = vmatpush1.msra.mxu0 %v121
    %152 = vmatprep.subr.mxu0 0.0
    %153 = vmatpush1.msra.mxu0 %v122
    %154 = vmatprep.subr.mxu0 0.0
    %155 = vmatpush1.msra.mxu0 %v123
    %156 = vmatprep.subr.mxu0 0.0
    %157 = vmatpush1.msra.mxu0 %v124
    %158 = vmatprep.subr.mxu0 0.0
    %159 = vmatpush1.msra.mxu0 %v125
    %160 = vmatprep.subr.mxu0 0.0
    %161 = vmatpush1.msra.mxu0 %v126
    %162 = vmatprep.subr.mxu0 0.0
    %163 = vmatpush1.msra.mxu0 %v127
    %164 = vmatprep.subr.mxu0 0.0
    %165 = vmatpush1.msra.mxu0 %v128
    %166 = vmatprep.subr.mxu0 0.0
    %167 = vmatpush1.msra.mxu0 %v129
    %168 = vmatprep.subr.mxu0 0.0
    %169 = vmatpush1.msra.mxu0 %v130
    %170 = vmatprep.subr.mxu0 0.0
    %171 = vmatpush1.msra.mxu0 0.0
    %172 = vmatprep.subr.mxu0 0.0
    %173 = vmatpush1.msra.mxu0 0.0
    %174 = vmatprep.subr.mxu0 0.0
    %175 = vmatpush1.msra.mxu0 0.0
    %176 = vmatprep.subr.mxu0 0.0
    %177 = vmatpush1.msra.mxu0 0.0
    %178 = vmatprep.subr.mxu0 0.0
    %179 = vmatpush1.msra.mxu0 0.0
    %180 = vmatprep.subr.mxu0 0.0
    %181 = vmatpush1.msra.mxu0 0.0
    %182 = vmatprep.subr.mxu0 0.0
    %183 = vmatpush1.msra.mxu0 0.0
    %184 = vmatprep.subr.mxu0 0.0
    %185 = vmatpush1.msra.mxu0 0.0
    %186 = vmatprep.subr.mxu0 0.0
    %187 = vmatpush1.msra.mxu0 0.0
    %188 = vmatprep.subr.mxu0 0.0
    %189 = vmatpush1.msra.mxu0 0.0
    %190 = vmatprep.subr.mxu0 0.0
    %191 = vmatpush1.msra.mxu0 0.0
    %192 = vmatprep.subr.mxu0 0.0
    %193 = vmatpush1.msra.mxu0 0.0
    %194 = vmatprep.subr.mxu0 0.0
    %195 = vmatpush1.msra.mxu0 0.0
    %196 = vmatprep.subr.mxu0 0.0
    %197 = vmatpush1.msra.mxu0 0.0
    %198 = vmatprep.subr.mxu0 0.0
    %199 = vmatpush1.msra.mxu0 0.0
    %200 = vmatprep.subr.mxu0 0.0
    %201 = vmatpush1.msra.mxu0 0.0
    %202 = vmatprep.mubr.f32.mxu0 0.0
    %203 = vmatmul.mubr.f32.gmra.mrb[0].mxu0 %v114
    %v204 = vpop.f32.mrb[0].mxu0
    %v205 = vadd.f32 %v136, %v204
    %v206 = vpop.f32.mrb[0].mxu0
    %207 = vdwg.mxu0
    %vm208 = vcmp.gt.f32.partialorder %v205, 0.0
    %v209 = vmul.f32 %v205, 0.01
    %v210 = vsel %vm208, %v205, %v209
    %v211 = vld [vmem:[#allocation8] sm:$0xff]
    %v212 = vld [vmem:[#allocation8 + $0x8] sm:$0xff]
    %v213 = vld [vmem:[#allocation8 + $0x10] sm:$0xff]
    %v214 = vld [vmem:[#allocation8 + $0x18] sm:$0xff]
    %v215 = vld [vmem:[#allocation8 + $0x20] sm:$0xff]
    %v216 = vld [vmem:[#allocation8 + $0x28] sm:$0xff]
    %v217 = vld [vmem:[#allocation8 + $0x30] sm:$0xff]
    %v218 = vld [vmem:[#allocation8 + $0x38] sm:$0xff]
    %v219 = vld [vmem:[#allocation8 + $0x40] sm:$0xff]
    %v220 = vld [vmem:[#allocation8 + $0x48] sm:$0xff]
    %v221 = vld [vmem:[#allocation8 + $0x50] sm:$0xff]
    %v222 = vld [vmem:[#allocation8 + $0x58] sm:$0xff]
    %v223 = vld [vmem:[#allocation8 + $0x60] sm:$0xff]
    %v224 = vld [vmem:[#allocation8 + $0x68] sm:$0xff]
    %v225 = vld [vmem:[#allocation8 + $0x70] sm:$0xff]
    %v226 = vld [vmem:[#allocation8 + $0x78] sm:$0xff]
    %v227 = vld [vmem:[#allocation10] sm:$0x1]
    %v229 = vlaneseq
    %v230 = vshrl.u32 %v229, 7
    %v231 = vsub.s32 0, %v230
    %v232 = vrot.slane %v227, %v231
    %234 = vmatprep.subr.mxu0 0.0
    %235 = vmatpush1.msra.mxu0 %v211
    %236 = vmatprep.subr.mxu0 0.0
    %237 = vmatpush1.msra.mxu0 %v212
    %238 = vmatprep.subr.mxu0 0.0
    %239 = vmatpush1.msra.mxu0 %v213
    %240 = vmatprep.subr.mxu0 0.0
    %241 = vmatpush1.msra.mxu0 %v214
    %242 = vmatprep.subr.mxu0 0.0
    %243 = vmatpush1.msra.mxu0 %v215
    %244 = vmatprep.subr.mxu0 0.0
    %245 = vmatpush1.msra.mxu0 %v216
    %246 = vmatprep.subr.mxu0 0.0
    %247 = vmatpush1.msra.mxu0 %v217
    %248 = vmatprep.subr.mxu0 0.0
    %249 = vmatpush1.msra.mxu0 %v218
    %250 = vmatprep.subr.mxu0 0.0
    %251 = vmatpush1.msra.mxu0 %v219
    %252 = vmatprep.subr.mxu0 0.0
    %253 = vmatpush1.msra.mxu0 %v220
    %254 = vmatprep.subr.mxu0 0.0
    %255 = vmatpush1.msra.mxu0 %v221
    %256 = vmatprep.subr.mxu0 0.0
    %257 = vmatpush1.msra.mxu0 %v222
    %258 = vmatprep.subr.mxu0 0.0
    %259 = vmatpush1.msra.mxu0 %v223
    %260 = vmatprep.subr.mxu0 0.0
    %261 = vmatpush1.msra.mxu0 %v224
    %262 = vmatprep.subr.mxu0 0.0
    %263 = vmatpush1.msra.mxu0 %v225
    %264 = vmatprep.subr.mxu0 0.0
    %265 = vmatpush1.msra.mxu0 %v226
    %266 = vmatprep.subr.mxu0 0.0
    %267 = vmatpush1.msra.mxu0 0.0
    %268 = vmatprep.subr.mxu0 0.0
    %269 = vmatpush1.msra.mxu0 0.0
    %270 = vmatprep.subr.mxu0 0.0
    %271 = vmatpush1.msra.mxu0 0.0
    %272 = vmatprep.subr.mxu0 0.0
    %273 = vmatpush1.msra.mxu0 0.0
    %274 = vmatprep.subr.mxu0 0.0
    %275 = vmatpush1.msra.mxu0 0.0
    %276 = vmatprep.subr.mxu0 0.0
    %277 = vmatpush1.msra.mxu0 0.0
    %278 = vmatprep.subr.mxu0 0.0
    %279 = vmatpush1.msra.mxu0 0.0
    %280 = vmatprep.subr.mxu0 0.0
    %281 = vmatpush1.msra.mxu0 0.0
    %282 = vmatprep.subr.mxu0 0.0
    %283 = vmatpush1.msra.mxu0 0.0
    %284 = vmatprep.subr.mxu0 0.0
    %285 = vmatpush1.msra.mxu0 0.0
    %286 = vmatprep.subr.mxu0 0.0
    %287 = vmatpush1.msra.mxu0 0.0
    %288 = vmatprep.subr.mxu0 0.0
    %289 = vmatpush1.msra.mxu0 0.0
    %290 = vmatprep.subr.mxu0 0.0
    %291 = vmatpush1.msra.mxu0 0.0
    %292 = vmatprep.subr.mxu0 0.0
    %293 = vmatpush1.msra.mxu0 0.0
    %294 = vmatprep.subr.mxu0 0.0
    %295 = vmatpush1.msra.mxu0 0.0
    %296 = vmatprep.subr.mxu0 0.0
    %297 = vmatpush1.msra.mxu0 0.0
    %298 = vmatprep.mubr.f32.mxu0 0.0
    %299 = vmatmul.mubr.f32.gmra.mrb[0].mxu0 %v210
    %v300 = vpop.f32.mrb[0].mxu0
    %v301 = vadd.f32 %v232, %v300
    %v302 = vpop.f32.mrb[0].mxu0
    %303 = vdwg.mxu0
    %vm304 = vcmp.gt.f32.partialorder %v301, 0.0
    %v305 = vmul.f32 %v301, 0.01
    %v306 = vsel %vm304, %v301, %v305
    %v307 = vld [vmem:[#allocation11] sm:$0xff]
    %v308 = vld [vmem:[#allocation11 + $0x8] sm:$0xff]
    %v309 = vld [vmem:[#allocation11 + $0x10] sm:$0xff]
    %v310 = vld [vmem:[#allocation11 + $0x18] sm:$0xff]
    %v311 = vld [vmem:[#allocation11 + $0x20] sm:$0xff]
    %v312 = vld [vmem:[#allocation11 + $0x28] sm:$0xff]
    %v313 = vld [vmem:[#allocation11 + $0x30] sm:$0xff]
    %v314 = vld [vmem:[#allocation11 + $0x38] sm:$0xff]
    %v315 = vld [vmem:[#allocation11 + $0x40] sm:$0xff]
    %v316 = vld [vmem:[#allocation11 + $0x48] sm:$0xff]
    %v317 = vld [vmem:[#allocation11 + $0x50] sm:$0xff]
    %v318 = vld [vmem:[#allocation11 + $0x58] sm:$0xff]
    %v319 = vld [vmem:[#allocation11 + $0x60] sm:$0xff]
    %v320 = vld [vmem:[#allocation11 + $0x68] sm:$0xff]
    %v321 = vld [vmem:[#allocation11 + $0x70] sm:$0xff]
    %v322 = vld [vmem:[#allocation11 + $0x78] sm:$0xff]
    %v323 = vld [vmem:[#allocation13] sm:$0x1]
    %v325 = vlaneseq
    %v326 = vshrl.u32 %v325, 7
    %v327 = vsub.s32 0, %v326
    %v328 = vrot.slane %v323, %v327
    %330 = vmatprep.subr.mxu0 0.0
    %331 = vmatpush1.msra.mxu0 %v307
    %332 = vmatprep.subr.mxu0 0.0
    %333 = vmatpush1.msra.mxu0 %v308
    %334 = vmatprep.subr.mxu0 0.0
    %335 = vmatpush1.msra.mxu0 %v309
    %336 = vmatprep.subr.mxu0 0.0
    %337 = vmatpush1.msra.mxu0 %v310
    %338 = vmatprep.subr.mxu0 0.0
    %339 = vmatpush1.msra.mxu0 %v311
    %340 = vmatprep.subr.mxu0 0.0
    %341 = vmatpush1.msra.mxu0 %v312
    %342 = vmatprep.subr.mxu0 0.0
    %343 = vmatpush1.msra.mxu0 %v313
    %344 = vmatprep.subr.mxu0 0.0
    %345 = vmatpush1.msra.mxu0 %v314
    %346 = vmatprep.subr.mxu0 0.0
    %347 = vmatpush1.msra.mxu0 %v315
    %348 = vmatprep.subr.mxu0 0.0
    %349 = vmatpush1.msra.mxu0 %v316
    %350 = vmatprep.subr.mxu0 0.0
    %351 = vmatpush1.msra.mxu0 %v317
    %352 = vmatprep.subr.mxu0 0.0
    %353 = vmatpush1.msra.mxu0 %v318
    %354 = vmatprep.subr.mxu0 0.0
    %355 = vmatpush1.msra.mxu0 %v319
    %356 = vmatprep.subr.mxu0 0.0
    %357 = vmatpush1.msra.mxu0 %v320
    %358 = vmatprep.subr.mxu0 0.0
    %359 = vmatpush1.msra.mxu0 %v321
    %360 = vmatprep.subr.mxu0 0.0
    %361 = vmatpush1.msra.mxu0 %v322
    %362 = vmatprep.subr.mxu0 0.0
    %363 = vmatpush1.msra.mxu0 0.0
    %364 = vmatprep.subr.mxu0 0.0
    %365 = vmatpush1.msra.mxu0 0.0
    %366 = vmatprep.subr.mxu0 0.0
    %367 = vmatpush1.msra.mxu0 0.0
    %368 = vmatprep.subr.mxu0 0.0
    %369 = vmatpush1.msra.mxu0 0.0
    %370 = vmatprep.subr.mxu0 0.0
    %371 = vmatpush1.msra.mxu0 0.0
    %372 = vmatprep.subr.mxu0 0.0
    %373 = vmatpush1.msra.mxu0 0.0
    %374 = vmatprep.subr.mxu0 0.0
    %375 = vmatpush1.msra.mxu0 0.0
    %376 = vmatprep.subr.mxu0 0.0
    %377 = vmatpush1.msra.mxu0 0.0
    %378 = vmatprep.subr.mxu0 0.0
    %379 = vmatpush1.msra.mxu0 0.0
    %380 = vmatprep.subr.mxu0 0.0
    %381 = vmatpush1.msra.mxu0 0.0
    %382 = vmatprep.subr.mxu0 0.0
    %383 = vmatpush1.msra.mxu0 0.0
    %384 = vmatprep.subr.mxu0 0.0
    %385 = vmatpush1.msra.mxu0 0.0
    %386 = vmatprep.subr.mxu0 0.0
    %387 = vmatpush1.msra.mxu0 0.0
    %388 = vmatprep.subr.mxu0 0.0
    %389 = vmatpush1.msra.mxu0 0.0
    %390 = vmatprep.subr.mxu0 0.0
    %391 = vmatpush1.msra.mxu0 0.0
    %392 = vmatprep.subr.mxu0 0.0
    %393 = vmatpush1.msra.mxu0 0.0
    %394 = vmatprep.mubr.f32.mxu0 0.0
    %395 = vmatmul.mubr.f32.gmra.mrb[0].mxu0 %v306
    %v396 = vpop.f32.mrb[0].mxu0
    %v397 = vadd.f32 %v328, %v396
    %v398 = vpop.f32.mrb[0].mxu0
    %399 = vdwg.mxu0
    %400 = vst [vmem:[#allocation14] sm:$0xff] %v397
    // Predicated region
    $region58: #{tpu_custom_call.1} parent=1 // pred_check
      _
    $region59: #{tpu_custom_call.1} parent=1 // pred_check_branch
      %402 = sbr.rel (0) target = $region61
    $region60: #{tpu_custom_call.1} parent=1 // pred_region
      %s404 = ssub.s32 128, 128
      %405 = vsyncadd [#allocation4], %s404
      %s407 = sshll.u32 [#allocation14], 4
      %s408 = int_to_ptr.vmem [resolvable:$true] %s407
      %410 = dma.vmem_to_hbm [thread:$0]  %s408, 128, %s7, [#allocation4]
    $region61: #{tpu_custom_call.1} parent=1 // pred_fallthru
      _
    // Predicated region
    $region62: #{tpu_custom_call.1} parent=1 // pred_check
      _
    $region63: #{tpu_custom_call.1} parent=1 // pred_check_branch
      %412 = sbr.rel (0) target = $region65
    $region64: #{tpu_custom_call.1} parent=1 // pred_region
      %413 = dma.done [#allocation4], 128
    $region65: #{tpu_custom_call.1} parent=1 // pred_fallthru
      _
    %414 = vsyncpa [#allocation3], 1
    %415 = vsyncpa [#allocation6], 1
    %416 = vsyncpa [#allocation9], 1
    %417 = vsyncpa [#allocation12], 1
    %418 = vsyncpa [#allocation4], 1

</llo_original>
